<compile_context>
chip_gen: v7x
topology: tpu7x:2x2x1
jax: 0.10.0
libtpu: 0.0.40
codegen_flags: <defaults>
</compile_context>

<pallas_src>
import math

import jax
import jax.numpy as jnp
from jax.experimental import pallas as pl
from jax.experimental.pallas import tpu as pltpu

# ----------------------------- model config ---------------------------------
SINC_OUT = 16
SINC_K = 251
SAMPLE_RATE = 20000.0
# (Cin, Cout, kernel, stride) for the 6 SFEB conv layers (kernel height is 1).
CONV_SPECS = [
    (16, 64, 20, 5),
    (64, 64, 11, 2),
    (64, 128, 11, 1),
    (128, 128, 10, 2),
    (128, 256, 11, 1),
    (256, 256, 10, 2),
]
D_MODEL = 256
N_LAYERS = 4
D_STATE = 64
BN_EPS = 1e-5
LN_EPS = 1e-5


def _round_up(v, m):
    return ((v + m - 1) // m) * m


# =============================================================================
# Pallas kernel 1: tiled matmul (bf16 operands, f32 accum) + bias + PReLU.
# BN scale is folded into the weights by the wrapper, so the epilogue is only
# bias-add + PReLU (kept in f32 — friendly to v5e's f32-only VPU).
# =============================================================================
def _matmul_bias_prelu_kernel(a_ref, w_ref, bias_ref, alpha_ref, o_ref):
    acc = jnp.dot(a_ref[...], w_ref[...], preferred_element_type=jnp.float32)
    y = acc + bias_ref[...]
    o_ref[...] = jnp.where(y >= 0.0, y, alpha_ref[...] * y)


def matmul_bias_prelu(a_bf16, w_bf16, bias_row, alpha_row, max_tile_m=512):
    """a: (M, Kp) bf16, w: (Kp, Np) bf16, bias/alpha: (1, Np) f32 -> (M, Np) f32."""
    M, K = a_bf16.shape
    _, N = w_bf16.shape
    tile_m = min(max_tile_m, _round_up(M, 16))      # bf16 sublane packing safe
    Mp = _round_up(M, tile_m)
    if Mp != M:
        a_bf16 = jnp.pad(a_bf16, ((0, Mp - M), (0, 0)))
    out = pl.pallas_call(
        _matmul_bias_prelu_kernel,
        out_shape=jax.ShapeDtypeStruct((Mp, N), jnp.float32),
        grid=(Mp // tile_m,),
        in_specs=[
            pl.BlockSpec((tile_m, K), lambda i: (i, 0)),
            pl.BlockSpec((K, N), lambda i: (0, 0)),     # weights stay VMEM-resident
            pl.BlockSpec((1, N), lambda i: (0, 0)),
            pl.BlockSpec((1, N), lambda i: (0, 0)),
        ],
        out_specs=pl.BlockSpec((tile_m, N), lambda i: (i, 0)),
        compiler_params=pltpu.CompilerParams(dimension_semantics=("parallel",)),
    )(a_bf16, w_bf16, bias_row, alpha_row)
    return out[:M] if Mp != M else out


def _im2col_1d(x, k, stride):
    """x: (B, L, C) -> (B*Lout, k*C) with tap-major / channel-minor ordering."""
    B, L, C = x.shape
    Lout = (L - k) // stride + 1
    idx = jnp.arange(Lout)[:, None] * stride + jnp.arange(k)[None, :]
    patches = x[:, idx, :]                     # (B, Lout, k, C)
    return patches.reshape(B * Lout, k * C), Lout


def conv1d_bn_prelu(x, w, stride, scale, bias, alpha):
    """x: (B, L, Cin) f32; w: PyTorch layout (Cout, Cin, k).

    BN (eval, running_mean=0 / running_var=1) is folded into the weights via
    `scale`; operands are padded to MXU-friendly shapes and cast to bf16.
    """
    # TODO(synk): at production input lengths the k=251 sinc im2col expands the
    # activation ~251x in HBM; build the taps in-kernel (or use an FFT conv)
    # for that layer if HBM bandwidth becomes the bottleneck.
    B, L, Cin = x.shape
    Cout, _, k = w.shape
    a2d, Lout = _im2col_1d(x, k, stride)                       # (B*Lout, k*Cin)
    wmat = jnp.transpose(w, (2, 1, 0)).reshape(k * Cin, Cout)  # tap-major, ch-minor
    wmat = wmat * scale.reshape(1, Cout)                       # fold BN scale

    K = k * Cin
    Kp = _round_up(K, 128)
    Np = _round_up(Cout, 128)
    a_bf = jnp.pad(a2d, ((0, 0), (0, Kp - K))).astype(jnp.bfloat16)
    w_bf = jnp.pad(wmat, ((0, Kp - K), (0, Np - Cout))).astype(jnp.bfloat16)
    bias_row = jnp.pad(bias.reshape(1, Cout).astype(jnp.float32),
                       ((0, 0), (0, Np - Cout)))
    alpha_row = jnp.broadcast_to(
        jnp.asarray(alpha, jnp.float32).reshape(1, -1), (1, Cout))
    alpha_row = jnp.pad(alpha_row, ((0, 0), (0, Np - Cout)))

    out = matmul_bias_prelu(a_bf, w_bf, bias_row, alpha_row)
    return out[:, :Cout].reshape(B, Lout, Cout)


# =============================================================================
# S4D stage.
# The causal SSM convolution is computed with an FFT in XLA (O(H L log L));
# the Pallas kernel fuses the rest of the block:
#   D skip + GELU + 1x1 conv H->2H (bf16 MXU) + GLU + residual + LayerNorm.
# =============================================================================
def causal_conv_fft(u, K):
    """u: (B, L, H) f32, K: (H, L) f32 -> causal conv s[t] = sum_{tau<=t} K[tau] u[t-tau]."""
    B, L, H = u.shape
    n = 2 * L
    uf = jnp.fft.rfft(u, n=n, axis=1)                    # (B, n//2+1, H)
    kf = jnp.fft.rfft(K, n=n, axis=-1)                   # (H, n//2+1)
    s = jnp.fft.irfft(uf * jnp.transpose(kf)[None], n=n, axis=1)[:, :L, :]
    return s.astype(jnp.float32)


def _s4_block_kernel(u_ref, s_ref, d_ref, wt_ref, b_ref, g_ref, beta_ref, o_ref):
    u = u_ref[0]                               # (L, H) f32
    s = s_ref[0]
    H = u.shape[-1]

    y = s + u * d_ref[...]                     # D skip connection

    # TODO(synk): PyTorch nn.GELU() is exact erf-based; using tanh approximation.
    c = jnp.float32(math.sqrt(2.0 / math.pi))
    y = 0.5 * y * (1.0 + jnp.tanh(c * (y + 0.044715 * y * y * y)))

    # output linear (1x1 conv H -> 2H) on the MXU in bf16, then GLU over halves
    z = jnp.dot(y.astype(jnp.bfloat16), wt_ref[...],
                preferred_element_type=jnp.float32) + b_ref[...]
    a = z[:, :H]
    g = z[:, H:]
    glu = a * jax.nn.sigmoid(g)

    x = glu + u                                # residual (dropout = identity, eval)

    # post-norm LayerNorm over d_model (lane reduction), rsqrt on the EUP
    mu = jnp.mean(x, axis=-1, keepdims=True)
    var = jnp.mean((x - mu) * (x - mu), axis=-1, keepdims=True)
    xn = (x - mu) * jax.lax.rsqrt(var + LN_EPS)
    o_ref[0] = xn * g_ref[...] + beta_ref[...]


def s4_block(u, s, d_row, wt_bf16, b_row, ln_gamma, ln_beta):
    B, L, H = u.shape
    return pl.pallas_call(
        _s4_block_kernel,
        out_shape=jax.ShapeDtypeStruct((B, L, H), jnp.float32),
        grid=(B,),
        in_specs=[
            pl.BlockSpec((1, L, H), lambda i: (i, 0, 0)),
            pl.BlockSpec((1, L, H), lambda i: (i, 0, 0)),
            pl.BlockSpec((1, H), lambda i: (0, 0)),
            pl.BlockSpec((H, 2 * H), lambda i: (0, 0)),
            pl.BlockSpec((1, 2 * H), lambda i: (0, 0)),
            pl.BlockSpec((1, H), lambda i: (0, 0)),
            pl.BlockSpec((1, H), lambda i: (0, 0)),
        ],
        out_specs=pl.BlockSpec((1, L, H), lambda i: (i, 0, 0)),
        compiler_params=pltpu.CompilerParams(dimension_semantics=("parallel",)),
    )(u, s, d_row, wt_bf16, b_row, ln_gamma, ln_beta)


# =============================================================================
# Head: (a) batch-tiled channel-mean + Linear(Lp,Lp) + PReLU(Lp) kernel,
#       (b) tiny bilinear contrastive-product kernel for the pt=True path.
# =============================================================================
def _head_linear_kernel(x_ref, w1t_ref, b1_ref, a1_ref, o_ref):
    x2 = jnp.mean(x_ref[...], axis=-1)                          # (1, Lp), mean over d_model
    y = jnp.dot(x2, w1t_ref[...], preferred_element_type=jnp.float32) + b1_ref[...]
    o_ref[0] = jnp.where(y >= 0.0, y, a1_ref[...] * y)          # per-feature PReLU


def head_linear(x, w1t, b1_row, a1_row):
    B, Lp, H = x.shape
    out = pl.pallas_call(
        _head_linear_kernel,
        out_shape=jax.ShapeDtypeStruct((B, 1, Lp), jnp.float32),
        grid=(B,),
        in_specs=[
            pl.BlockSpec((1, Lp, H), lambda i: (i, 0, 0)),
            pl.BlockSpec((Lp, Lp), lambda i: (0, 0)),
            pl.BlockSpec((1, Lp), lambda i: (0, 0)),
            pl.BlockSpec((1, Lp), lambda i: (0, 0)),
        ],
        out_specs=pl.BlockSpec((1, 1, Lp), lambda i: (i, 0, 0)),
        compiler_params=pltpu.CompilerParams(dimension_semantics=("parallel",)),
    )(x, w1t, b1_row, a1_row)
    return out.reshape(B, Lp)


def _bilinear_kernel(es_ref, ep_ref, w_ref, o_ref):
    # cont = embed_sound @ (W_bil @ embed_positive^T) == (es @ W_bil) @ ep^T
    tmp = jnp.dot(es_ref[...], w_ref[...], preferred_element_type=jnp.float32)
    o_ref[...] = jax.lax.dot_general(
        tmp, ep_ref[...], (((1,), (1,)), ((), ())),
        preferred_element_type=jnp.float32)


def bilinear_product(es, ep, wbil):
    half, Lp = es.shape
    return pl.pallas_call(
        _bilinear_kernel,
        out_shape=jax.ShapeDtypeStruct((half, half), jnp.float32),
        grid=(1,),
        in_specs=[
            pl.BlockSpec((half, Lp), lambda i: (0, 0)),
            pl.BlockSpec((half, Lp), lambda i: (0, 0)),
            pl.BlockSpec((Lp, Lp), lambda i: (0, 0)),
        ],
        out_specs=pl.BlockSpec((half, half), lambda i: (0, 0)),
    )(es, ep, wbil)


# =============================================================================
# Parameter construction (deterministic, in-script) and JAX glue.
# =============================================================================
def _sinc_mel_init(out_channels, sample_rate, min_low_hz=50.0, min_band_hz=50.0):
    def to_mel(hz):
        return 2595.0 * jnp.log10(1.0 + hz / 700.0)

    def to_hz(mel):
        return 700.0 * (10.0 ** (mel / 2595.0) - 1.0)

    low_hz = 30.0
    high_hz = sample_rate / 2.0 - (min_low_hz + min_band_hz)
    mel = jnp.linspace(to_mel(low_hz), to_mel(high_hz), out_channels + 1)
    hz = to_hz(mel)
    return hz[:-1].reshape(-1, 1), jnp.diff(hz).reshape(-1, 1)


def make_sinc_filters(low_hz_, band_hz_, kernel_size, sample_rate,
                      min_low_hz=50.0, min_band_hz=50.0):
    half = kernel_size // 2
    n_lin = jnp.linspace(0.0, kernel_size / 2.0 - 1.0, half)
    window = 0.54 - 0.46 * jnp.cos(2.0 * math.pi * n_lin / kernel_size)
    n = (kernel_size - 1) / 2.0
    n_ = (2.0 * math.pi * jnp.arange(-n, 0.0) / sample_rate)[None, :]   # (1, half)

    low = min_low_hz + jnp.abs(low_hz_)                                  # (C, 1)
    high = jnp.clip(low + min_band_hz + jnp.abs(band_hz_),
                    min_low_hz, sample_rate / 2.0)
    band = (high - low)[:, 0]

    f_low = low * n_
    f_high = high * n_
    bp_left = ((jnp.sin(f_high) - jnp.sin(f_low)) / (n_ / 2.0)) * window[None, :]
    bp_center = 2.0 * band[:, None]
    bp_right = jnp.flip(bp_left, axis=1)
    band_pass = jnp.concatenate([bp_left, bp_center, bp_right], axis=1)
    band_pass = band_pass / (2.0 * band[:, None])
    return band_pass.astype(jnp.float32)                                 # (C, kernel_size)


def _conv_out_len(L, k, s):
    return (L - k) // s + 1


def compute_final_len(L_in):
    L = _conv_out_len(L_in, SINC_K, 1)
    for (_, _, k, s) in CONV_SPECS:
        L = _conv_out_len(L, k, s)
    return L


def s4d_ssm_kernel(layer, L):
    """S4DKernel.forward: Vandermonde evaluation of the diagonal SSM kernel."""
    dt = jnp.exp(layer["log_dt"])                                  # (H,)
    C = layer["C"][..., 0] + 1j * layer["C"][..., 1]               # (H, N/2)
    A = -jnp.exp(layer["log_A_real"]) + 1j * layer["A_imag"]       # (H, N/2)
    dtA = A * dt[:, None]
    C_eff = C * (jnp.exp(dtA) - 1.0) / A
    vand = jnp.exp(dtA[:, :, None] * jnp.arange(L))                # (H, N/2, L)
    K = 2.0 * jnp.einsum("hn,hnl->hl", C_eff, vand).real
    return K.astype(jnp.float32)                                   # (H, L)


def init_params(key, L_in):
    keys = iter(jax.random.split(key, 64))
    p = {}

    low, band = _sinc_mel_init(SINC_OUT, SAMPLE_RATE)
    p["sinc_low"] = low.astype(jnp.float32)
    p["sinc_band"] = band.astype(jnp.float32)

    convs = []
    for (cin, cout, k, _s) in CONV_SPECS:
        std = math.sqrt(2.0 / (cin * k))                    # kaiming_normal_, relu
        w = jax.random.normal(next(keys), (cout, cin, k), jnp.float32) * std
        gamma = 1.0 + 0.1 * jax.random.normal(next(keys), (cout,), jnp.float32)
        beta = 0.1 * jax.random.normal(next(keys), (cout,), jnp.float32)
        convs.append((w, gamma, beta))
    p["convs"] = convs

    H, N2 = D_MODEL, D_STATE // 2
    s4 = []
    for _ in range(N_LAYERS):
        log_dt = (jax.random.uniform(next(keys), (H,), jnp.float32)
                  * (math.log(0.1) - math.log(0.001)) + math.log(0.001))
        bound = 1.0 / math.sqrt(H)
        s4.append(dict(
            log_dt=log_dt,
            C=jax.random.normal(next(keys), (H, N2, 2), jnp.float32),
            log_A_real=jnp.log(0.5 * jnp.ones((H, N2), jnp.float32)),
            A_imag=math.pi * jnp.broadcast_to(
                jnp.arange(N2, dtype=jnp.float32), (H, N2)),
            D=jax.random.normal(next(keys), (H,), jnp.float32),
            W_out=jax.random.uniform(next(keys), (2 * H, H), jnp.float32, -bound, bound),
            b_out=jax.random.uniform(next(keys), (2 * H,), jnp.float32, -bound, bound),
            ln_gamma=jnp.ones((H,), jnp.float32),
            ln_beta=jnp.zeros((H,), jnp.float32),
        ))
    p["s4"] = s4

    # NOTE: the PyTorch module hard-codes 735 (full-scale input length after SFEB);
    # at this small demo input the analogous length is compute_final_len(L_in).
    Lp = compute_final_len(L_in)
    bnd = 1.0 / math.sqrt(Lp)
    p["head"] = dict(
        W1=jax.random.uniform(next(keys), (Lp, Lp), jnp.float32, -bnd, bnd),
        b1=jax.random.uniform(next(keys), (Lp,), jnp.float32, -bnd, bnd),
        alpha1=0.25 * jnp.ones((Lp,), jnp.float32),
        Wbil=jax.random.normal(next(keys), (Lp, Lp), jnp.float32),
    )
    return p


def s4model_ss5_forward(x, params, pt=True):
    """x: (B, L, d_input=1) float32, matching the PyTorch forward contract."""
    B, L, _ = x.shape

    # --- SincConv_fast: build band-pass filters, 1-D conv (no activation) ----
    filt = make_sinc_filters(params["sinc_low"], params["sinc_band"],
                             SINC_K, SAMPLE_RATE)              # (16, 251)
    w_sinc = filt.reshape(SINC_OUT, 1, SINC_K)
    h = conv1d_bn_prelu(
        x, w_sinc, stride=1,
        scale=jnp.ones((SINC_OUT,), jnp.float32),
        bias=jnp.zeros((SINC_OUT,), jnp.float32),
        alpha=1.0)                                             # (B, Ls, 16)
    # x.reshape(B, 16, 1, -1) is a no-op in this channels-last layout.

    # --- SFEB: 6 x (Conv2d(1,k) + BatchNorm(eval) + PReLU) -------------------
    for (w, gamma, beta), (_, _, _, stride) in zip(params["convs"], CONV_SPECS):
        scale = gamma / jnp.sqrt(1.0 + BN_EPS)   # running_mean=0, running_var=1
        h = conv1d_bn_prelu(h, w, stride=stride, scale=scale, bias=beta, alpha=0.25)
    # h: (B, Lp, d_model)   (PyTorch: (B, d_model, Lp) after squeeze(2))

    # --- S4D stack: FFT causal conv (XLA) + fused Pallas block ----------------
    for layer in params["s4"]:
        K = s4d_ssm_kernel(layer, h.shape[1])                  # (H, Lp)
        s = causal_conv_fft(h, K)                              # (B, Lp, H)
        h = s4_block(
            h, s,
            layer["D"].reshape(1, -1),
            jnp.transpose(layer["W_out"]).astype(jnp.bfloat16),   # (H, 2H) bf16
            layer["b_out"].reshape(1, -1),
            layer["ln_gamma"].reshape(1, -1),
            layer["ln_beta"].reshape(1, -1),
        )

    # --- head: mean over d_model, Linear+PReLU, optional bilinear product ----
    hd = params["head"]
    xc = head_linear(h, jnp.transpose(hd["W1"]),
                     hd["b1"].reshape(1, -1), hd["alpha1"].reshape(1, -1))
    if not pt:
        return xc
    half = B // 2
    return bilinear_product(xc[:half], xc[half:], hd["Wbil"])


if __name__ == "__main__":
    key = jax.random.PRNGKey(0)
    kx, kp = jax.random.split(key)

    B, L_in, d_input = 2, 1024, 1          # small demo shapes (B even for pt split)
    x = jax.random.normal(kx, (B, L_in, d_input), jnp.float32)
    params = init_params(kp, L_in)

    out_pt = s4model_ss5_forward(x, params, pt=True)      # (B//2, B//2)
    jax.block_until_ready(out_pt)
    out_nopt = s4model_ss5_forward(x, params, pt=False)   # (B, Lp)
    jax.block_until_ready(out_nopt)

    print("KERNEL_OK")
</pallas_src>

<mosaic_0001>
module attributes {stable_mosaic.version = 11 : i64} {
  func.func @_matmul_bias_prelu_kernel(%arg0: i32, %arg1: memref<512x256xbf16, #tpu.memory_space<vmem>>, %arg2: memref<256x128xbf16, #tpu.memory_space<vmem>>, %arg3: memref<1x128xf32, #tpu.memory_space<vmem>>, %arg4: memref<1x128xf32, #tpu.memory_space<vmem>>, %arg5: memref<512x128xf32, #tpu.memory_space<vmem>>) attributes {dimension_semantics = [#tpu.dimension_semantics<parallel>], iteration_bounds = array<i64: 4>, scalar_prefetch = 0 : i64, scratch_operands = 0 : i64, tpu.core_type = #tpu.core_type<tc>, window_params = [{transform_indices = @transform_0, window_bounds = array<i64: 512, 256>}, {pipeline_mode = #tpu.pipeline_mode<synchronous>, transform_indices = @transform_1, window_bounds = array<i64: 256, 128>}, {pipeline_mode = #tpu.pipeline_mode<synchronous>, transform_indices = @transform_2, window_bounds = array<i64: 1, 128>}, {pipeline_mode = #tpu.pipeline_mode<synchronous>, transform_indices = @transform_3, window_bounds = array<i64: 1, 128>}, {transform_indices = @transform_4, window_bounds = array<i64: 512, 128>}]} {
    %c0 = arith.constant 0 : index
    %c0_0 = arith.constant 0 : index
    %0 = vector.load %arg1[%c0, %c0_0] : memref<512x256xbf16, #tpu.memory_space<vmem>>, vector<512x256xbf16>
    %c0_1 = arith.constant 0 : index
    %c0_2 = arith.constant 0 : index
    %1 = vector.load %arg2[%c0_1, %c0_2] : memref<256x128xbf16, #tpu.memory_space<vmem>>, vector<256x128xbf16>
    %cst = arith.constant dense<0.000000e+00> : vector<512x128xf32>
    %2 = tpu.matmul %0, %1, %cst {dimension_numbers = #tpu.dot_dimension_numbers<[1], [0], [0], [1], [0, 0, 1, 1], [], []>} : vector<512x256xbf16>, vector<256x128xbf16>, vector<512x128xf32> -> vector<512x128xf32>
    %c0_3 = arith.constant 0 : index
    %c0_4 = arith.constant 0 : index
    %3 = vector.load %arg3[%c0_3, %c0_4] : memref<1x128xf32, #tpu.memory_space<vmem>>, vector<1x128xf32>
    %4 = vector.broadcast %3 : vector<1x128xf32> to vector<512x128xf32>
    %5 = arith.addf %2, %4 : vector<512x128xf32>
    %cst_5 = arith.constant 0.000000e+00 : f32
    %6 = vector.broadcast %cst_5 : f32 to vector<512x128xf32>
    %7 = arith.cmpf oge, %5, %6 : vector<512x128xf32>
    %c0_6 = arith.constant 0 : index
    %c0_7 = arith.constant 0 : index
    %8 = vector.load %arg4[%c0_6, %c0_7] : memref<1x128xf32, #tpu.memory_space<vmem>>, vector<1x128xf32>
    %9 = vector.broadcast %8 : vector<1x128xf32> to vector<512x128xf32>
    %10 = arith.mulf %9, %5 : vector<512x128xf32>
    %11 = arith.select %7, %5, %10 : vector<512x128xi1>, vector<512x128xf32>
    %c0_8 = arith.constant 0 : index
    %c0_9 = arith.constant 0 : index
    %12 = vector.load %arg5[%c0_8, %c0_9] : memref<512x128xf32, #tpu.memory_space<vmem>>, vector<512x128xf32>
    tpu.vector_store %arg5[%c0_8, %c0_9], %11 {strides = array<i32>} : memref<512x128xf32, #tpu.memory_space<vmem>>, vector<512x128xf32>,
    return
  }
  func.func @transform_0(%arg0: i32) -> (i32, i32) {
    %c0_i32 = arith.constant 0 : i32
    %c0_i32_0 = arith.constant 0 : i32
    return %arg0, %c0_i32 : i32, i32
  }
  func.func @transform_1(%arg0: i32) -> (i32, i32) {
    %c0_i32 = arith.constant 0 : i32
    %c0_i32_0 = arith.constant 0 : i32
    %c0_i32_1 = arith.constant 0 : i32
    return %c0_i32, %c0_i32_0 : i32, i32
  }
  func.func @transform_2(%arg0: i32) -> (i32, i32) {
    %c0_i32 = arith.constant 0 : i32
    %c0_i32_0 = arith.constant 0 : i32
    %c0_i32_1 = arith.constant 0 : i32
    return %c0_i32, %c0_i32_0 : i32, i32
  }
  func.func @transform_3(%arg0: i32) -> (i32, i32) {
    %c0_i32 = arith.constant 0 : i32
    %c0_i32_0 = arith.constant 0 : i32
    %c0_i32_1 = arith.constant 0 : i32
    return %c0_i32, %c0_i32_0 : i32, i32
  }
  func.func @transform_4(%arg0: i32) -> (i32, i32) {
    %c0_i32 = arith.constant 0 : i32
    %c0_i32_0 = arith.constant 0 : i32
    return %arg0, %c0_i32 : i32, i32
  }
}

</mosaic_0001>

<llo_original>
// kernel: tpu_custom_call.1
$region0: #{tpu_custom_call.1}
  #allocation0 [shape = 'u32[]', space=smem, size = 0x4, offset = 0x4, fixed_abs, tag = 'smem constant byte address 0x4 - core index']
  #allocation1 [shape = 'u32[144,128]{1,0:T(1,128)}', space=vmem, size = 0x12000, scoped, tag = 'internal scratch']
  %s0 = inlined_call_operand.hbm [shape: bf16[2048,256], index: 0, kind: input, shape index: {}]
  %s1 = inlined_call_operand.hbm [shape: bf16[256,128], index: 1, kind: input, shape index: {}]
  %s2 = inlined_call_operand.vmem [shape: f32[1,128], index: 2, kind: input, shape index: {}]
  %s3 = inlined_call_operand.vmem [shape: f32[1,128], index: 3, kind: input, shape index: {}]
  %s4 = inlined_call_operand.hbm [shape: f32[2048,128], index: 4, kind: output, shape index: {}]
  %s5 = sld [smem:[#allocation0]]
  $region57: #{tpu_custom_call.1} parent=0
    _
  %s7 = ssub.s32 1, %s5
  %s8 = scalar_select 0, %s7, %s5
  $region1: #{tpu_custom_call.1} parent=0
    #allocation2 [shape = 'u8[524288]{0}', space=vmem, size = 0x80000, scoped, tag = 'input window, operand 0']
    #allocation3 [shape = 's32[2]{0}', space=sflag, size = 0x8, scoped, tag = 'scoped memory for tpu_custom_call.1']
    #allocation4 [shape = 's32[2]{0}', space=sflag, size = 0x8, scoped, tag = 'scoped memory for tpu_custom_call.1']
    #allocation5 [shape = 'u8[65536]{0}', space=vmem, size = 0x10000, scoped, tag = 'input window, operand 1, single buffered']
    #allocation6 [shape = 's32[1]{0}', space=sflag, size = 0x4, scoped, tag = 'scoped memory for tpu_custom_call.1']
    #allocation7 [shape = 'u8[524288]{0}', space=vmem, size = 0x80000, scoped, tag = 'output window, operand 0']
    %9 = vsyncpa [#allocation3], 0
    %s10 = scalar_lea.sflag [#allocation3], 1
    %11 = vsyncpa %s10, 0
    %12 = vsyncpa [#allocation6], 0
    %13 = vsyncpa [#allocation4], 0
    %s14 = scalar_lea.sflag [#allocation4], 1
    %15 = vsyncpa %s14, 0
    loop: start=0, step=1, limit=6
    $region2: #{tpu_custom_call.1} parent=1 // loop_pre_header
      _
    $region3: #{tpu_custom_call.1} parent=1 // loop_header
      %s17 = sphi 0, %s21
      %p18 = scmp.ge.s32.totalorder %s17, 6
      %s27 = sphi 0, %s29
      %s30 = sphi 0, %s27
      %s31 = sphi 0, %s30
      %s47 = sphi 0, %s31
      %s51 = sphi 0, %s51
      %s53 = sphi 0, %s51
      %s54 = sphi 0, %s53
      %s68 = sphi 0, %s54
      %s72 = sphi 0, %s72
      %s74 = sphi 0, %s72
      %s75 = sphi 0, %s74
      %s89 = sphi 0, %s75
      %s93 = sphi 0, %s93
      %s95 = sphi 0, %s93
      %s96 = sphi 0, %s95
      %s110 = sphi 0, %s96
      %s116 = sphi 0, %s118
      %s119 = sphi 0, %s116
      %s120 = sphi 0, %s119
      %s136 = sphi 0, %s120
    $region4: #{tpu_custom_call.1} parent=1 // loop_header_branch
      %20 = sbr.rel (%p18) target = $region8
    $region5: #{tpu_custom_call.1} parent=1 // loop_body
      %s22 = ssub.s32 %s17, 1
      %s23 = ssub.s32 %s17, 2
      %s24 = sadd.s32 %s17, 1
      %s25 = ssub.s32 %s17, %s24
      %p26 = scmp.eq.s32.totalorder %s25, 0
      %s28 = sadd.s32 %s27, 1
      %s29 = scalar_select %p26, %s27, %s28
      %p32 = pneg %p26
      %p33 = scmp.eq.s32.totalorder %s17, 3
      %p34 = por %p32, %p33
      %p35 = scmp.ne.s32.totalorder %s27, %s30
      %p36 = scmp.eq.s32.totalorder %s17, 0
      %p37 = por %p35, %p36
      %p38 = scmp.ne.s32.totalorder %s27, %s30
      %p39 = scmp.eq.s32.totalorder %s22, 3
      %p40 = por %p38, %p39
      %p41 = scmp.ne.s32.totalorder %s30, %s31
      %p42 = scmp.eq.s32.totalorder %s22, 0
      %p43 = por %p41, %p42
      %p44 = scmp.ne.s32.totalorder %s30, %s31
      %p45 = scmp.eq.s32.totalorder %s23, 3
      %p46 = por %p44, %p45
      %p48 = scmp.ne.s32.totalorder %s31, %s47
      %p49 = scmp.eq.s32.totalorder %s23, 0
      %p50 = por %p48, %p49
      %s52 = sadd.s32 %s51, 1
      %p55 = scmp.eq.s32.totalorder %s17, 3
      %p56 = scmp.ne.s32.totalorder %s51, %s53
      %p57 = scmp.eq.s32.totalorder %s17, 0
      %p58 = por %p56, %p57
      %p59 = scmp.ne.s32.totalorder %s51, %s53
      %p60 = scmp.eq.s32.totalorder %s22, 3
      %p61 = por %p59, %p60
      %p62 = scmp.ne.s32.totalorder %s53, %s54
      %p63 = scmp.eq.s32.totalorder %s22, 0
      %p64 = por %p62, %p63
      %p65 = scmp.ne.s32.totalorder %s53, %s54
      %p66 = scmp.eq.s32.totalorder %s23, 3
      %p67 = por %p65, %p66
      %p69 = scmp.ne.s32.totalorder %s54, %s68
      %p70 = scmp.eq.s32.totalorder %s23, 0
      %p71 = por %p69, %p70
      %s73 = sadd.s32 %s72, 1
      %p76 = scmp.eq.s32.totalorder %s17, 3
      %p77 = scmp.ne.s32.totalorder %s72, %s74
      %p78 = scmp.eq.s32.totalorder %s17, 0
      %p79 = por %p77, %p78
      %p80 = scmp.ne.s32.totalorder %s72, %s74
      %p81 = scmp.eq.s32.totalorder %s22, 3
      %p82 = por %p80, %p81
      %p83 = scmp.ne.s32.totalorder %s74, %s75
      %p84 = scmp.eq.s32.totalorder %s22, 0
      %p85 = por %p83, %p84
      %p86 = scmp.ne.s32.totalorder %s74, %s75
      %p87 = scmp.eq.s32.totalorder %s23, 3
      %p88 = por %p86, %p87
      %p90 = scmp.ne.s32.totalorder %s75, %s89
      %p91 = scmp.eq.s32.totalorder %s23, 0
      %p92 = por %p90, %p91
      %s94 = sadd.s32 %s93, 1
      %p97 = scmp.eq.s32.totalorder %s17, 3
      %p98 = scmp.ne.s32.totalorder %s93, %s95
      %p99 = scmp.eq.s32.totalorder %s17, 0
      %p100 = por %p98, %p99
      %p101 = scmp.ne.s32.totalorder %s93, %s95
      %p102 = scmp.eq.s32.totalorder %s22, 3
      %p103 = por %p101, %p102
      %p104 = scmp.ne.s32.totalorder %s95, %s96
      %p105 = scmp.eq.s32.totalorder %s22, 0
      %p106 = por %p104, %p105
      %p107 = scmp.ne.s32.totalorder %s95, %s96
      %p108 = scmp.eq.s32.totalorder %s23, 3
      %p109 = por %p107, %p108
      %p111 = scmp.ne.s32.totalorder %s96, %s110
      %p112 = scmp.eq.s32.totalorder %s23, 0
      %p113 = por %p111, %p112
      %s114 = ssub.s32 %s17, %s24
      %p115 = scmp.eq.s32.totalorder %s114, 0
      %s117 = sadd.s32 %s116, 1
      %s118 = scalar_select %p115, %s116, %s117
      %p121 = pneg %p115
      %p122 = scmp.eq.s32.totalorder %s17, 3
      %p123 = por %p121, %p122
      %p124 = scmp.ne.s32.totalorder %s116, %s119
      %p125 = scmp.eq.s32.totalorder %s17, 0
      %p126 = por %p124, %p125
      %p127 = scmp.ne.s32.totalorder %s116, %s119
      %p128 = scmp.eq.s32.totalorder %s22, 3
      %p129 = por %p127, %p128
      %p130 = scmp.ne.s32.totalorder %s119, %s120
      %p131 = scmp.eq.s32.totalorder %s22, 0
      %p132 = por %p130, %p131
      %p133 = scmp.ne.s32.totalorder %s119, %s120
      %p134 = scmp.eq.s32.totalorder %s23, 3
      %p135 = por %p133, %p134
      %p137 = scmp.ne.s32.totalorder %s120, %s136
      %p138 = scmp.eq.s32.totalorder %s23, 0
      %p139 = por %p137, %p138
      %p140 = scmp.le.s32.totalorder 1, %s17
      %p141 = scmp.lt.s32.totalorder %s17, 5
      %p142 = pnand %p140, %p141
      %p143 = pneg %p142
      // Predicated region
      $region9: #{tpu_custom_call.1} parent=5 // pred_check
        _
      $region10: #{tpu_custom_call.1} parent=5 // pred_check_branch
        %145 = sbr.rel (%p142) target = $region12
      $region11: #{tpu_custom_call.1} parent=5 // pred_region
        %s146 = ssub.s32 %s17, 1
        // Predicated region
        $region13: #{tpu_custom_call.1} parent=11 // pred_check
          %p147 = pneg %p64
        $region14: #{tpu_custom_call.1} parent=11 // pred_check_branch
          %149 = sbr.rel (%p147) target = $region16
        $region15: #{tpu_custom_call.1} parent=11 // pred_region
          %s151 = ssub.s32 2048, 2048
          %152 = vsyncadd [#allocation6], %s151
          %s153 = sshll.u32 [#allocation5], 4
          %s154 = int_to_ptr.vmem [resolvable:$true] %s153
          %159 = dma.hbm_to_vmem [thread:$0]  %s1, 2048, %s154, [#allocation6], 64, 64, 4
        $region16: #{tpu_custom_call.1} parent=11 // pred_fallthru
          _
        // Predicated region
        $region17: #{tpu_custom_call.1} parent=11 // pred_check
          %p160 = pneg %p85
        $region18: #{tpu_custom_call.1} parent=11 // pred_check_branch
          %162 = sbr.rel (%p160) target = $region20
        $region19: #{tpu_custom_call.1} parent=11 // pred_region
          _
        $region20: #{tpu_custom_call.1} parent=11 // pred_fallthru
          _
        // Predicated region
        $region21: #{tpu_custom_call.1} parent=11 // pred_check
          %p163 = pneg %p106
        $region22: #{tpu_custom_call.1} parent=11 // pred_check_branch
          %165 = sbr.rel (%p163) target = $region24
        $region23: #{tpu_custom_call.1} parent=11 // pred_region
          _
        $region24: #{tpu_custom_call.1} parent=11 // pred_fallthru
          _
      $region12: #{tpu_custom_call.1} parent=5 // pred_fallthru
        _
      %p166 = scmp.lt.s32.totalorder %s17, 4
      // Predicated region
      $region25: #{tpu_custom_call.1} parent=5 // pred_check
        %p167 = pneg %p166
      $region26: #{tpu_custom_call.1} parent=5 // pred_check_branch
        %169 = sbr.rel (%p167) target = $region28
      $region27: #{tpu_custom_call.1} parent=5 // pred_region
        // Predicated region
        $region29: #{tpu_custom_call.1} parent=27 // pred_check
          %p170 = pneg %p37
        $region30: #{tpu_custom_call.1} parent=27 // pred_check_branch
          %172 = sbr.rel (%p170) target = $region32
        $region31: #{tpu_custom_call.1} parent=27 // pred_region
          %s173 = sand.u32 %s27, 1
          %s174 = scalar_lea.sflag [#allocation3], %s173
          %s175 = sand.u32 %s27, 1
          %s176 = smul.addr %s175, 512
          %s177 = scalar_lea.vmem [#allocation2], %s176
          %s178 = smul.u32 64, %s17
          %s180 = ssub.s32 8192, 8192
          %181 = vsyncadd %s174, %s180
          %s182 = smul.addr %s178, 2
          %s183 = smul.addr %s182, 64
          %s184 = scalar_lea.hbm %s0, %s183
          %s185 = sshll.u32 %s177, 4
          %s186 = int_to_ptr.vmem [resolvable:$true] %s185
          %191 = dma.hbm_to_vmem [thread:$0]  %s184, 8192, %s186, %s174, 128, 128, 8
        $region32: #{tpu_custom_call.1} parent=27 // pred_fallthru
          _
      $region28: #{tpu_custom_call.1} parent=5 // pred_fallthru
        _
      %p192 = scmp.le.s32.totalorder 1, %s17
      %p193 = scmp.lt.s32.totalorder %s17, 5
      %p194 = pnand %p192, %p193
      %p195 = pneg %p194
      // Predicated region
      $region33: #{tpu_custom_call.1} parent=5 // pred_check
        _
      $region34: #{tpu_custom_call.1} parent=5 // pred_check_branch
        %197 = sbr.rel (%p194) target = $region36
      $region35: #{tpu_custom_call.1} parent=5 // pred_region
        %s198 = ssub.s32 %s17, 1
        %s199 = sand.u32 %s30, 1
        %s200 = scalar_lea.sflag [#allocation3], %s199
        %s201 = sand.u32 %s30, 1
        %s202 = smul.addr %s201, 512
        %s203 = scalar_lea.vmem [#allocation2], %s202
        // Predicated region
        $region37: #{tpu_custom_call.1} parent=35 // pred_check
          %p204 = pneg %p43
        $region38: #{tpu_custom_call.1} parent=35 // pred_check_branch
          %206 = sbr.rel (%p204) target = $region40
        $region39: #{tpu_custom_call.1} parent=35 // pred_region
          %207 = dma.done %s200, 8192
        $region40: #{tpu_custom_call.1} parent=35 // pred_fallthru
          _
        // Predicated region
        $region41: #{tpu_custom_call.1} parent=35 // pred_check
          %p208 = pneg %p64
        $region42: #{tpu_custom_call.1} parent=35 // pred_check_branch
          %210 = sbr.rel (%p208) target = $region44
        $region43: #{tpu_custom_call.1} parent=35 // pred_region
          %211 = dma.done [#allocation6], 2048
        $region44: #{tpu_custom_call.1} parent=35 // pred_fallthru
          _
        %s212 = sand.u32 %s30, 1
        %s213 = scalar_lea.sflag [#allocation3], %s212
        %s214 = sand.u32 %s30, 1
        %s215 = smul.addr %s214, 512
        %s216 = scalar_lea.vmem [#allocation2], %s215
        %p217 = pneg %p43
        %p218 = pneg %p40
        %p219 = pneg %p64
        %p220 = pneg %p61
        %p221 = pneg %p85
        %p222 = pneg %p82
        %p223 = pneg %p106
        %p224 = pneg %p103
        %p225 = pneg %p132
        %p226 = pneg %p129
        %s227 = sand.u32 %s119, 1
        %s228 = scalar_lea.sflag [#allocation4], %s227
        %s229 = sand.u32 %s119, 1
        %s230 = smul.addr %s229, 512
        %s231 = scalar_lea.vmem [#allocation7], %s230
        %s232 = smul.u32 64, %s22
        %s233 = smul.u32 64, %s22
        %v235 = vld [vmem:[%s203] sm:$0xff]
        %v236 = vld [vmem:[%s203 + $0x8] sm:$0xff]
        %v237 = vld [vmem:[%s203 + $0x10] sm:$0xff]
        %v238 = vld [vmem:[%s203 + $0x18] sm:$0xff]
        %v239 = vld [vmem:[%s203 + $0x20] sm:$0xff]
        %v240 = vld [vmem:[%s203 + $0x28] sm:$0xff]
        %v241 = vld [vmem:[%s203 + $0x30] sm:$0xff]
        %v242 = vld [vmem:[%s203 + $0x38] sm:$0xff]
        %v243 = vld [vmem:[%s203 + $0x40] sm:$0xff]
        %v244 = vld [vmem:[%s203 + $0x48] sm:$0xff]
        %v245 = vld [vmem:[%s203 + $0x50] sm:$0xff]
        %v246 = vld [vmem:[%s203 + $0x58] sm:$0xff]
        %v247 = vld [vmem:[%s203 + $0x60] sm:$0xff]
        %v248 = vld [vmem:[%s203 + $0x68] sm:$0xff]
        %v249 = vld [vmem:[%s203 + $0x70] sm:$0xff]
        %v250 = vld [vmem:[%s203 + $0x78] sm:$0xff]
        %v251 = vld [vmem:[%s203 + $0x80] sm:$0xff]
        %v252 = vld [vmem:[%s203 + $0x88] sm:$0xff]
        %v253 = vld [vmem:[%s203 + $0x90] sm:$0xff]
        %v254 = vld [vmem:[%s203 + $0x98] sm:$0xff]
        %v255 = vld [vmem:[%s203 + $0xa0] sm:$0xff]
        %v256 = vld [vmem:[%s203 + $0xa8] sm:$0xff]
        %v257 = vld [vmem:[%s203 + $0xb0] sm:$0xff]
        %v258 = vld [vmem:[%s203 + $0xb8] sm:$0xff]
        %v259 = vld [vmem:[%s203 + $0xc0] sm:$0xff]
        %v260 = vld [vmem:[%s203 + $0xc8] sm:$0xff]
        %v261 = vld [vmem:[%s203 + $0xd0] sm:$0xff]
        %v262 = vld [vmem:[%s203 + $0xd8] sm:$0xff]
        %v263 = vld [vmem:[%s203 + $0xe0] sm:$0xff]
        %v264 = vld [vmem:[%s203 + $0xe8] sm:$0xff]
        %v265 = vld [vmem:[%s203 + $0xf0] sm:$0xff]
        %v266 = vld [vmem:[%s203 + $0xf8] sm:$0xff]
        %v267 = vld [vmem:[%s203 + $0x100] sm:$0xff]
        %v268 = vld [vmem:[%s203 + $0x108] sm:$0xff]
        %v269 = vld [vmem:[%s203 + $0x110] sm:$0xff]
        %v270 = vld [vmem:[%s203 + $0x118] sm:$0xff]
        %v271 = vld [vmem:[%s203 + $0x120] sm:$0xff]
        %v272 = vld [vmem:[%s203 + $0x128] sm:$0xff]
        %v273 = vld [vmem:[%s203 + $0x130] sm:$0xff]
        %v274 = vld [vmem:[%s203 + $0x138] sm:$0xff]
        %v275 = vld [vmem:[%s203 + $0x140] sm:$0xff]
        %v276 = vld [vmem:[%s203 + $0x148] sm:$0xff]
        %v277 = vld [vmem:[%s203 + $0x150] sm:$0xff]
        %v278 = vld [vmem:[%s203 + $0x158] sm:$0xff]
        %v279 = vld [vmem:[%s203 + $0x160] sm:$0xff]
        %v280 = vld [vmem:[%s203 + $0x168] sm:$0xff]
        %v281 = vld [vmem:[%s203 + $0x170] sm:$0xff]
        %v282 = vld [vmem:[%s203 + $0x178] sm:$0xff]
        %v283 = vld [vmem:[%s203 + $0x180] sm:$0xff]
        %v284 = vld [vmem:[%s203 + $0x188] sm:$0xff]
        %v285 = vld [vmem:[%s203 + $0x190] sm:$0xff]
        %v286 = vld [vmem:[%s203 + $0x198] sm:$0xff]
        %v287 = vld [vmem:[%s203 + $0x1a0] sm:$0xff]
        %v288 = vld [vmem:[%s203 + $0x1a8] sm:$0xff]
        %v289 = vld [vmem:[%s203 + $0x1b0] sm:$0xff]
        %v290 = vld [vmem:[%s203 + $0x1b8] sm:$0xff]
        %v291 = vld [vmem:[%s203 + $0x1c0] sm:$0xff]
        %v292 = vld [vmem:[%s203 + $0x1c8] sm:$0xff]
        %v293 = vld [vmem:[%s203 + $0x1d0] sm:$0xff]
        %v294 = vld [vmem:[%s203 + $0x1d8] sm:$0xff]
        %v295 = vld [vmem:[%s203 + $0x1e0] sm:$0xff]
        %v296 = vld [vmem:[%s203 + $0x1e8] sm:$0xff]
        %v297 = vld [vmem:[%s203 + $0x1f0] sm:$0xff]
        %v298 = vld [vmem:[%s203 + $0x1f8] sm:$0xff]
        %v299 = vld [vmem:[#allocation5] sm:$0xf]
        %v300 = vld [vmem:[#allocation5 + $0x4] sm:$0xf]
        %v301 = vld [vmem:[#allocation5 + $0x8] sm:$0xf]
        %v302 = vld [vmem:[#allocation5 + $0xc] sm:$0xf]
        %v303 = vld [vmem:[#allocation5 + $0x10] sm:$0xf]
        %v304 = vld [vmem:[#allocation5 + $0x14] sm:$0xf]
        %v305 = vld [vmem:[#allocation5 + $0x18] sm:$0xf]
        %v306 = vld [vmem:[#allocation5 + $0x1c] sm:$0xf]
        %v307 = vld [vmem:[#allocation5 + $0x20] sm:$0xf]
        %v308 = vld [vmem:[#allocation5 + $0x24] sm:$0xf]
        %v309 = vld [vmem:[#allocation5 + $0x28] sm:$0xf]
        %v310 = vld [vmem:[#allocation5 + $0x2c] sm:$0xf]
        %v311 = vld [vmem:[#allocation5 + $0x30] sm:$0xf]
        %v312 = vld [vmem:[#allocation5 + $0x34] sm:$0xf]
        %v313 = vld [vmem:[#allocation5 + $0x38] sm:$0xf]
        %v314 = vld [vmem:[#allocation5 + $0x3c] sm:$0xf]
        %v315 = vld [vmem:[#allocation5 + $0x40] sm:$0xf]
        %v316 = vld [vmem:[#allocation5 + $0x44] sm:$0xf]
        %v317 = vld [vmem:[#allocation5 + $0x48] sm:$0xf]
        %v318 = vld [vmem:[#allocation5 + $0x4c] sm:$0xf]
        %v319 = vld [vmem:[#allocation5 + $0x50] sm:$0xf]
        %v320 = vld [vmem:[#allocation5 + $0x54] sm:$0xf]
        %v321 = vld [vmem:[#allocation5 + $0x58] sm:$0xf]
        %v322 = vld [vmem:[#allocation5 + $0x5c] sm:$0xf]
        %v323 = vld [vmem:[#allocation5 + $0x60] sm:$0xf]
        %v324 = vld [vmem:[#allocation5 + $0x64] sm:$0xf]
        %v325 = vld [vmem:[#allocation5 + $0x68] sm:$0xf]
        %v326 = vld [vmem:[#allocation5 + $0x6c] sm:$0xf]
        %v327 = vld [vmem:[#allocation5 + $0x70] sm:$0xf]
        %v328 = vld [vmem:[#allocation5 + $0x74] sm:$0xf]
        %v329 = vld [vmem:[#allocation5 + $0x78] sm:$0xf]
        %v330 = vld [vmem:[#allocation5 + $0x7c] sm:$0xf]
        %v331 = vld [vmem:[%s2] sm:$0x1]
        %v333 = vlaneseq
        %v334 = vshrl.u32 %v333, 7
        %v335 = vsub.s32 0, %v334
        %v336 = vrot.slane %v331, %v335
        %v402 = vunpack.c.l.b16 %v235
        %v403 = vunpack.c.h.b16 %v235
        %v404 = vunpack.c.l.b16 %v236
        %v405 = vunpack.c.h.b16 %v236
        %v406 = vunpack.c.l.b16 %v237
        %v407 = vunpack.c.h.b16 %v237
        %v408 = vunpack.c.l.b16 %v238
        %v409 = vunpack.c.h.b16 %v238
        %v410 = vunpack.c.l.b16 %v239
        %v411 = vunpack.c.h.b16 %v239
        %v412 = vunpack.c.l.b16 %v240
        %v413 = vunpack.c.h.b16 %v240
        %v414 = vunpack.c.l.b16 %v241
        %v415 = vunpack.c.h.b16 %v241
        %v416 = vunpack.c.l.b16 %v242
        %v417 = vunpack.c.h.b16 %v242
        %v418 = vunpack.c.l.b16 %v243
        %v419 = vunpack.c.h.b16 %v243
        %v420 = vunpack.c.l.b16 %v244
        %v421 = vunpack.c.h.b16 %v244
        %v422 = vunpack.c.l.b16 %v245
        %v423 = vunpack.c.h.b16 %v245
        %v424 = vunpack.c.l.b16 %v246
        %v425 = vunpack.c.h.b16 %v246
        %v426 = vunpack.c.l.b16 %v247
        %v427 = vunpack.c.h.b16 %v247
        %v428 = vunpack.c.l.b16 %v248
        %v429 = vunpack.c.h.b16 %v248
        %v430 = vunpack.c.l.b16 %v249
        %v431 = vunpack.c.h.b16 %v249
        %v432 = vunpack.c.l.b16 %v250
        %v433 = vunpack.c.h.b16 %v250
        %v434 = vunpack.c.l.b16 %v251
        %v435 = vunpack.c.h.b16 %v251
        %v436 = vunpack.c.l.b16 %v252
        %v437 = vunpack.c.h.b16 %v252
        %v438 = vunpack.c.l.b16 %v253
        %v439 = vunpack.c.h.b16 %v253
        %v440 = vunpack.c.l.b16 %v254
        %v441 = vunpack.c.h.b16 %v254
        %v442 = vunpack.c.l.b16 %v255
        %v443 = vunpack.c.h.b16 %v255
        %v444 = vunpack.c.l.b16 %v256
        %v445 = vunpack.c.h.b16 %v256
        %v446 = vunpack.c.l.b16 %v257
        %v447 = vunpack.c.h.b16 %v257
        %v448 = vunpack.c.l.b16 %v258
        %v449 = vunpack.c.h.b16 %v258
        %v450 = vunpack.c.l.b16 %v259
        %v451 = vunpack.c.h.b16 %v259
        %v452 = vunpack.c.l.b16 %v260
        %v453 = vunpack.c.h.b16 %v260
        %v454 = vunpack.c.l.b16 %v261
        %v455 = vunpack.c.h.b16 %v261
        %v456 = vunpack.c.l.b16 %v262
        %v457 = vunpack.c.h.b16 %v262
        %v458 = vunpack.c.l.b16 %v263
        %v459 = vunpack.c.h.b16 %v263
        %v460 = vunpack.c.l.b16 %v264
        %v461 = vunpack.c.h.b16 %v264
        %v462 = vunpack.c.l.b16 %v265
        %v463 = vunpack.c.h.b16 %v265
        %v464 = vunpack.c.l.b16 %v266
        %v465 = vunpack.c.h.b16 %v266
        %v466 = vunpack.c.l.b16 %v267
        %v467 = vunpack.c.h.b16 %v267
        %v468 = vunpack.c.l.b16 %v268
        %v469 = vunpack.c.h.b16 %v268
        %v470 = vunpack.c.l.b16 %v269
        %v471 = vunpack.c.h.b16 %v269
        %v472 = vunpack.c.l.b16 %v270
        %v473 = vunpack.c.h.b16 %v270
        %v474 = vunpack.c.l.b16 %v271
        %v475 = vunpack.c.h.b16 %v271
        %v476 = vunpack.c.l.b16 %v272
        %v477 = vunpack.c.h.b16 %v272
        %v478 = vunpack.c.l.b16 %v273
        %v479 = vunpack.c.h.b16 %v273
        %v480 = vunpack.c.l.b16 %v274
        %v481 = vunpack.c.h.b16 %v274
        %v482 = vunpack.c.l.b16 %v275
        %v483 = vunpack.c.h.b16 %v275
        %v484 = vunpack.c.l.b16 %v276
        %v485 = vunpack.c.h.b16 %v276
        %v486 = vunpack.c.l.b16 %v277
        %v487 = vunpack.c.h.b16 %v277
        %v488 = vunpack.c.l.b16 %v278
        %v489 = vunpack.c.h.b16 %v278
        %v490 = vunpack.c.l.b16 %v279
        %v491 = vunpack.c.h.b16 %v279
        %v492 = vunpack.c.l.b16 %v280
        %v493 = vunpack.c.h.b16 %v280
        %v494 = vunpack.c.l.b16 %v281
        %v495 = vunpack.c.h.b16 %v281
        %v496 = vunpack.c.l.b16 %v282
        %v497 = vunpack.c.h.b16 %v282
        %v498 = vunpack.c.l.b16 %v283
        %v499 = vunpack.c.h.b16 %v283
        %v500 = vunpack.c.l.b16 %v284
        %v501 = vunpack.c.h.b16 %v284
        %v502 = vunpack.c.l.b16 %v285
        %v503 = vunpack.c.h.b16 %v285
        %v504 = vunpack.c.l.b16 %v286
        %v505 = vunpack.c.h.b16 %v286
        %v506 = vunpack.c.l.b16 %v287
        %v507 = vunpack.c.h.b16 %v287
        %v508 = vunpack.c.l.b16 %v288
        %v509 = vunpack.c.h.b16 %v288
        %v510 = vunpack.c.l.b16 %v289
        %v511 = vunpack.c.h.b16 %v289
        %v512 = vunpack.c.l.b16 %v290
        %v513 = vunpack.c.h.b16 %v290
        %v514 = vunpack.c.l.b16 %v291
        %v515 = vunpack.c.h.b16 %v291
        %v516 = vunpack.c.l.b16 %v292
        %v517 = vunpack.c.h.b16 %v292
        %v518 = vunpack.c.l.b16 %v293
        %v519 = vunpack.c.h.b16 %v293
        %v520 = vunpack.c.l.b16 %v294
        %v521 = vunpack.c.h.b16 %v294
        %v522 = vunpack.c.l.b16 %v295
        %v523 = vunpack.c.h.b16 %v295
        %v524 = vunpack.c.l.b16 %v296
        %v525 = vunpack.c.h.b16 %v296
        %v526 = vunpack.c.l.b16 %v297
        %v527 = vunpack.c.h.b16 %v297
        %v528 = vunpack.c.l.b16 %v298
        %v529 = vunpack.c.h.b16 %v298
        %v530 = vpack.c.b16 %v404, %v402
        %v531 = vpack.c.b16 %v405, %v403
        %v532 = vpack.c.b16 %v408, %v406
        %v533 = vpack.c.b16 %v409, %v407
        %v534 = vpack.c.b16 %v412, %v410
        %v535 = vpack.c.b16 %v413, %v411
        %v536 = vpack.c.b16 %v416, %v414
        %v537 = vpack.c.b16 %v417, %v415
        %v538 = vpack.c.b16 %v420, %v418
        %v539 = vpack.c.b16 %v421, %v419
        %v540 = vpack.c.b16 %v424, %v422
        %v541 = vpack.c.b16 %v425, %v423
        %v542 = vpack.c.b16 %v428, %v426
        %v543 = vpack.c.b16 %v429, %v427
        %v544 = vpack.c.b16 %v432, %v430
        %v545 = vpack.c.b16 %v433, %v431
        %v546 = vpack.c.b16 %v436, %v434
        %v547 = vpack.c.b16 %v437, %v435
        %v548 = vpack.c.b16 %v440, %v438
        %v549 = vpack.c.b16 %v441, %v439
        %v550 = vpack.c.b16 %v444, %v442
        %v551 = vpack.c.b16 %v445, %v443
        %v552 = vpack.c.b16 %v448, %v446
        %v553 = vpack.c.b16 %v449, %v447
        %v554 = vpack.c.b16 %v452, %v450
        %v555 = vpack.c.b16 %v453, %v451
        %v556 = vpack.c.b16 %v456, %v454
        %v557 = vpack.c.b16 %v457, %v455
        %v558 = vpack.c.b16 %v460, %v458
        %v559 = vpack.c.b16 %v461, %v459
        %v560 = vpack.c.b16 %v464, %v462
        %v561 = vpack.c.b16 %v465, %v463
        %v562 = vpack.c.b16 %v468, %v466
        %v563 = vpack.c.b16 %v469, %v467
        %v564 = vpack.c.b16 %v472, %v470
        %v565 = vpack.c.b16 %v473, %v471
        %v566 = vpack.c.b16 %v476, %v474
        %v567 = vpack.c.b16 %v477, %v475
        %v568 = vpack.c.b16 %v480, %v478
        %v569 = vpack.c.b16 %v481, %v479
        %v570 = vpack.c.b16 %v484, %v482
        %v571 = vpack.c.b16 %v485, %v483
        %v572 = vpack.c.b16 %v488, %v486
        %v573 = vpack.c.b16 %v489, %v487
        %v574 = vpack.c.b16 %v492, %v490
        %v575 = vpack.c.b16 %v493, %v491
        %v576 = vpack.c.b16 %v496, %v494
        %v577 = vpack.c.b16 %v497, %v495
        %v578 = vpack.c.b16 %v500, %v498
        %v579 = vpack.c.b16 %v501, %v499
        %v580 = vpack.c.b16 %v504, %v502
        %v581 = vpack.c.b16 %v505, %v503
        %v582 = vpack.c.b16 %v508, %v506
        %v583 = vpack.c.b16 %v509, %v507
        %v584 = vpack.c.b16 %v512, %v510
        %v585 = vpack.c.b16 %v513, %v511
        %v586 = vpack.c.b16 %v516, %v514
        %v587 = vpack.c.b16 %v517, %v515
        %v588 = vpack.c.b16 %v520, %v518
        %v589 = vpack.c.b16 %v521, %v519
        %v590 = vpack.c.b16 %v524, %v522
        %v591 = vpack.c.b16 %v525, %v523
        %v592 = vpack.c.b16 %v528, %v526
        %v593 = vpack.c.b16 %v529, %v527
        %v690 = vunpack.c.l.b16 %v299
        %v691 = vunpack.c.l.b16 %v300
        %v692 = vunpack.c.l.b16 %v301
        %v693 = vunpack.c.l.b16 %v302
        %v694 = vunpack.c.l.b16 %v303
        %v695 = vunpack.c.l.b16 %v304
        %v696 = vunpack.c.l.b16 %v305
        %v697 = vunpack.c.l.b16 %v306
        %v698 = vunpack.c.l.b16 %v307
        %v699 = vunpack.c.l.b16 %v308
        %v700 = vunpack.c.l.b16 %v309
        %v701 = vunpack.c.l.b16 %v310
        %v702 = vunpack.c.l.b16 %v311
        %v703 = vunpack.c.l.b16 %v312
        %v704 = vunpack.c.l.b16 %v313
        %v705 = vunpack.c.l.b16 %v314
        %v706 = vunpack.c.l.b16 %v315
        %v707 = vunpack.c.l.b16 %v316
        %v708 = vunpack.c.l.b16 %v317
        %v709 = vunpack.c.l.b16 %v318
        %v710 = vunpack.c.l.b16 %v319
        %v711 = vunpack.c.l.b16 %v320
        %v712 = vunpack.c.l.b16 %v321
        %v713 = vunpack.c.l.b16 %v322
        %v714 = vunpack.c.l.b16 %v323
        %v715 = vunpack.c.l.b16 %v324
        %v716 = vunpack.c.l.b16 %v325
        %v717 = vunpack.c.l.b16 %v326
        %v718 = vunpack.c.l.b16 %v327
        %v719 = vunpack.c.l.b16 %v328
        %v720 = vunpack.c.l.b16 %v329
        %v721 = vunpack.c.l.b16 %v330
        %v722 = vpack.c.b16 %v691, %v690
        %v723 = vpack.c.b16 %v693, %v692
        %v724 = vpack.c.b16 %v695, %v694
        %v725 = vpack.c.b16 %v697, %v696
        %v726 = vpack.c.b16 %v699, %v698
        %v727 = vpack.c.b16 %v701, %v700
        %v728 = vpack.c.b16 %v703, %v702
        %v729 = vpack.c.b16 %v705, %v704
        %v730 = vpack.c.b16 %v707, %v706
        %v731 = vpack.c.b16 %v709, %v708
        %v732 = vpack.c.b16 %v711, %v710
        %v733 = vpack.c.b16 %v713, %v712
        %v734 = vpack.c.b16 %v715, %v714
        %v735 = vpack.c.b16 %v717, %v716
        %v736 = vpack.c.b16 %v719, %v718
        %v737 = vpack.c.b16 %v721, %v720
        %754 = vmatprep.subr.bf16.mxu0 0
        %755 = vmatpush1.bf16.msra.mxu0 %v722
        %756 = vmatprep.subr.bf16.mxu0 0
        %757 = vmatpush1.bf16.msra.mxu0 %v723
        %758 = vmatprep.subr.bf16.mxu0 0
        %759 = vmatpush1.bf16.msra.mxu0 %v724
        %760 = vmatprep.subr.bf16.mxu0 0
        %761 = vmatpush1.bf16.msra.mxu0 %v725
        %762 = vmatprep.subr.bf16.mxu0 0
        %763 = vmatpush1.bf16.msra.mxu0 %v726
        %764 = vmatprep.subr.bf16.mxu0 0
        %765 = vmatpush1.bf16.msra.mxu0 %v727
        %766 = vmatprep.subr.bf16.mxu0 0
        %767 = vmatpush1.bf16.msra.mxu0 %v728
        %768 = vmatprep.subr.bf16.mxu0 0
        %769 = vmatpush1.bf16.msra.mxu0 %v729
        %770 = vmatprep.subr.bf16.mxu0 0
        %771 = vmatpush1.bf16.msra.mxu0 %v730
        %772 = vmatprep.subr.bf16.mxu0 0
        %773 = vmatpush1.bf16.msra.mxu0 %v731
        %774 = vmatprep.subr.bf16.mxu0 0
        %775 = vmatpush1.bf16.msra.mxu0 %v732
        %776 = vmatprep.subr.bf16.mxu0 0
        %777 = vmatpush1.bf16.msra.mxu0 %v733
        %778 = vmatprep.subr.bf16.mxu0 0
        %779 = vmatpush1.bf16.msra.mxu0 %v734
        %780 = vmatprep.subr.bf16.mxu0 0
        %781 = vmatpush1.bf16.msra.mxu0 %v735
        %782 = vmatprep.subr.bf16.mxu0 0
        %783 = vmatpush1.bf16.msra.mxu0 %v736
        %784 = vmatprep.subr.bf16.mxu0 0
        %785 = vmatpush1.bf16.msra.mxu0 %v737
        %786 = vmatprep.mubr.bf16.mxu0 %v531
        %787 = vmatmul.mubr.bf16.gmra.mrb[0].mxu0 %v530
        %v788 = vpop.f32.mrb[0].mxu0
        %v789 = vadd.f32 %v336, %v788
        %v790 = vpop.f32.mrb[0].mxu0
        %v791 = vpop.f32.mrb[0].mxu0
        %v792 = vadd.f32 %v336, %v791
        %v793 = vpop.f32.mrb[0].mxu0
        %794 = vmatprep.mubr.bf16.mxu0 %v533
        %795 = vmatmul.mubr.bf16.gmra.mrb[0].mxu0 %v532
        %v796 = vpop.f32.mrb[0].mxu0
        %v797 = vadd.f32 %v336, %v796
        %v798 = vpop.f32.mrb[0].mxu0
        %v799 = vpop.f32.mrb[0].mxu0
        %v800 = vadd.f32 %v336, %v799
        %v801 = vpop.f32.mrb[0].mxu0
        %802 = vmatprep.mubr.bf16.mxu0 %v535
        %803 = vmatmul.mubr.bf16.gmra.mrb[0].mxu0 %v534
        %v804 = vpop.f32.mrb[0].mxu0
        %v805 = vadd.f32 %v336, %v804
        %v806 = vpop.f32.mrb[0].mxu0
        %v807 = vpop.f32.mrb[0].mxu0
        %v808 = vadd.f32 %v336, %v807
        %v809 = vpop.f32.mrb[0].mxu0
        %810 = vmatprep.mubr.bf16.mxu0 %v537
        %811 = vmatmul.mubr.bf16.gmra.mrb[0].mxu0 %v536
        %v812 = vpop.f32.mrb[0].mxu0
        %v813 = vadd.f32 %v336, %v812
        %v814 = vpop.f32.mrb[0].mxu0
        %v815 = vpop.f32.mrb[0].mxu0
        %v816 = vadd.f32 %v336, %v815
        %v817 = vpop.f32.mrb[0].mxu0
        %818 = vmatprep.mubr.bf16.mxu0 %v539
        %819 = vmatmul.mubr.bf16.gmra.mrb[0].mxu0 %v538
        %v820 = vpop.f32.mrb[0].mxu0
        %v821 = vadd.f32 %v336, %v820
        %v822 = vpop.f32.mrb[0].mxu0
        %v823 = vpop.f32.mrb[0].mxu0
        %v824 = vadd.f32 %v336, %v823
        %v825 = vpop.f32.mrb[0].mxu0
        %826 = vmatprep.mubr.bf16.mxu0 %v541
        %827 = vmatmul.mubr.bf16.gmra.mrb[0].mxu0 %v540
        %v828 = vpop.f32.mrb[0].mxu0
        %v829 = vadd.f32 %v336, %v828
        %v830 = vpop.f32.mrb[0].mxu0
        %v831 = vpop.f32.mrb[0].mxu0
        %v832 = vadd.f32 %v336, %v831
        %v833 = vpop.f32.mrb[0].mxu0
        %834 = vmatprep.mubr.bf16.mxu0 %v543
        %835 = vmatmul.mubr.bf16.gmra.mrb[0].mxu0 %v542
        %v836 = vpop.f32.mrb[0].mxu0
        %v837 = vadd.f32 %v336, %v836
        %v838 = vpop.f32.mrb[0].mxu0
        %v839 = vpop.f32.mrb[0].mxu0
        %v840 = vadd.f32 %v336, %v839
        %v841 = vpop.f32.mrb[0].mxu0
        %842 = vmatprep.mubr.bf16.mxu0 %v545
        %843 = vmatmul.mubr.bf16.gmra.mrb[0].mxu0 %v544
        %v844 = vpop.f32.mrb[0].mxu0
        %v845 = vadd.f32 %v336, %v844
        %v846 = vpop.f32.mrb[0].mxu0
        %v847 = vpop.f32.mrb[0].mxu0
        %v848 = vadd.f32 %v336, %v847
        %v849 = vpop.f32.mrb[0].mxu0
        %850 = vmatprep.mubr.bf16.mxu0 %v547
        %851 = vmatmul.mubr.bf16.gmra.mrb[0].mxu0 %v546
        %v852 = vpop.f32.mrb[0].mxu0
        %v853 = vadd.f32 %v336, %v852
        %v854 = vpop.f32.mrb[0].mxu0
        %v855 = vpop.f32.mrb[0].mxu0
        %v856 = vadd.f32 %v336, %v855
        %v857 = vpop.f32.mrb[0].mxu0
        %858 = vmatprep.mubr.bf16.mxu0 %v549
        %859 = vmatmul.mubr.bf16.gmra.mrb[0].mxu0 %v548
        %v860 = vpop.f32.mrb[0].mxu0
        %v861 = vadd.f32 %v336, %v860
        %v862 = vpop.f32.mrb[0].mxu0
        %v863 = vpop.f32.mrb[0].mxu0
        %v864 = vadd.f32 %v336, %v863
        %v865 = vpop.f32.mrb[0].mxu0
        %866 = vmatprep.mubr.bf16.mxu0 %v551
        %867 = vmatmul.mubr.bf16.gmra.mrb[0].mxu0 %v550
        %v868 = vpop.f32.mrb[0].mxu0
        %v869 = vadd.f32 %v336, %v868
        %v870 = vpop.f32.mrb[0].mxu0
        %v871 = vpop.f32.mrb[0].mxu0
        %v872 = vadd.f32 %v336, %v871
        %v873 = vpop.f32.mrb[0].mxu0
        %874 = vmatprep.mubr.bf16.mxu0 %v553
        %875 = vmatmul.mubr.bf16.gmra.mrb[0].mxu0 %v552
        %v876 = vpop.f32.mrb[0].mxu0
        %v877 = vadd.f32 %v336, %v876
        %v878 = vpop.f32.mrb[0].mxu0
        %v879 = vpop.f32.mrb[0].mxu0
        %v880 = vadd.f32 %v336, %v879
        %v881 = vpop.f32.mrb[0].mxu0
        %882 = vmatprep.mubr.bf16.mxu0 %v555
        %883 = vmatmul.mubr.bf16.gmra.mrb[0].mxu0 %v554
        %v884 = vpop.f32.mrb[0].mxu0
        %v885 = vadd.f32 %v336, %v884
        %v886 = vpop.f32.mrb[0].mxu0
        %v887 = vpop.f32.mrb[0].mxu0
        %v888 = vadd.f32 %v336, %v887
        %v889 = vpop.f32.mrb[0].mxu0
        %890 = vmatprep.mubr.bf16.mxu0 %v557
        %891 = vmatmul.mubr.bf16.gmra.mrb[0].mxu0 %v556
        %v892 = vpop.f32.mrb[0].mxu0
        %v893 = vadd.f32 %v336, %v892
        %v894 = vpop.f32.mrb[0].mxu0
        %v895 = vpop.f32.mrb[0].mxu0
        %v896 = vadd.f32 %v336, %v895
        %v897 = vpop.f32.mrb[0].mxu0
        %898 = vmatprep.mubr.bf16.mxu0 %v559
        %899 = vmatmul.mubr.bf16.gmra.mrb[0].mxu0 %v558
        %v900 = vpop.f32.mrb[0].mxu0
        %v901 = vadd.f32 %v336, %v900
        %v902 = vpop.f32.mrb[0].mxu0
        %v903 = vpop.f32.mrb[0].mxu0
        %v904 = vadd.f32 %v336, %v903
        %v905 = vpop.f32.mrb[0].mxu0
        %906 = vmatprep.mubr.bf16.mxu0 %v561
        %907 = vmatmul.mubr.bf16.gmra.mrb[0].mxu0 %v560
        %v908 = vpop.f32.mrb[0].mxu0
        %v909 = vadd.f32 %v336, %v908
        %v910 = vpop.f32.mrb[0].mxu0
        %v911 = vpop.f32.mrb[0].mxu0
        %v912 = vadd.f32 %v336, %v911
        %v913 = vpop.f32.mrb[0].mxu0
        %914 = vmatprep.mubr.bf16.mxu0 %v563
        %915 = vmatmul.mubr.bf16.gmra.mrb[0].mxu0 %v562
        %v916 = vpop.f32.mrb[0].mxu0
        %v917 = vadd.f32 %v336, %v916
        %v918 = vpop.f32.mrb[0].mxu0
        %v919 = vpop.f32.mrb[0].mxu0
        %v920 = vadd.f32 %v336, %v919
        %v921 = vpop.f32.mrb[0].mxu0
        %922 = vmatprep.mubr.bf16.mxu0 %v565
        %923 = vmatmul.mubr.bf16.gmra.mrb[0].mxu0 %v564
        %v924 = vpop.f32.mrb[0].mxu0
        %v925 = vadd.f32 %v336, %v924
        %v926 = vpop.f32.mrb[0].mxu0
        %v927 = vpop.f32.mrb[0].mxu0
        %v928 = vadd.f32 %v336, %v927
        %v929 = vpop.f32.mrb[0].mxu0
        %930 = vmatprep.mubr.bf16.mxu0 %v567
        %931 = vmatmul.mubr.bf16.gmra.mrb[0].mxu0 %v566
        %v932 = vpop.f32.mrb[0].mxu0
        %v933 = vadd.f32 %v336, %v932
        %v934 = vpop.f32.mrb[0].mxu0
        %v935 = vpop.f32.mrb[0].mxu0
        %v936 = vadd.f32 %v336, %v935
        %v937 = vpop.f32.mrb[0].mxu0
        %938 = vmatprep.mubr.bf16.mxu0 %v569
        %939 = vmatmul.mubr.bf16.gmra.mrb[0].mxu0 %v568
        %v940 = vpop.f32.mrb[0].mxu0
        %v941 = vadd.f32 %v336, %v940
        %v942 = vpop.f32.mrb[0].mxu0
        %v943 = vpop.f32.mrb[0].mxu0
        %v944 = vadd.f32 %v336, %v943
        %v945 = vpop.f32.mrb[0].mxu0
        %946 = vmatprep.mubr.bf16.mxu0 %v571
        %947 = vmatmul.mubr.bf16.gmra.mrb[0].mxu0 %v570
        %v948 = vpop.f32.mrb[0].mxu0
        %v949 = vadd.f32 %v336, %v948
        %v950 = vpop.f32.mrb[0].mxu0
        %v951 = vpop.f32.mrb[0].mxu0
        %v952 = vadd.f32 %v336, %v951
        %v953 = vpop.f32.mrb[0].mxu0
        %954 = vmatprep.mubr.bf16.mxu0 %v573
        %955 = vmatmul.mubr.bf16.gmra.mrb[0].mxu0 %v572
        %v956 = vpop.f32.mrb[0].mxu0
        %v957 = vadd.f32 %v336, %v956
        %v958 = vpop.f32.mrb[0].mxu0
        %v959 = vpop.f32.mrb[0].mxu0
        %v960 = vadd.f32 %v336, %v959
        %v961 = vpop.f32.mrb[0].mxu0
        %962 = vmatprep.mubr.bf16.mxu0 %v575
        %963 = vmatmul.mubr.bf16.gmra.mrb[0].mxu0 %v574
        %v964 = vpop.f32.mrb[0].mxu0
        %v965 = vadd.f32 %v336, %v964
        %v966 = vpop.f32.mrb[0].mxu0
        %v967 = vpop.f32.mrb[0].mxu0
        %v968 = vadd.f32 %v336, %v967
        %v969 = vpop.f32.mrb[0].mxu0
        %970 = vmatprep.mubr.bf16.mxu0 %v577
        %971 = vmatmul.mubr.bf16.gmra.mrb[0].mxu0 %v576
        %v972 = vpop.f32.mrb[0].mxu0
        %v973 = vadd.f32 %v336, %v972
        %v974 = vpop.f32.mrb[0].mxu0
        %v975 = vpop.f32.mrb[0].mxu0
        %v976 = vadd.f32 %v336, %v975
        %v977 = vpop.f32.mrb[0].mxu0
        %978 = vmatprep.mubr.bf16.mxu0 %v579
        %979 = vmatmul.mubr.bf16.gmra.mrb[0].mxu0 %v578
        %v980 = vpop.f32.mrb[0].mxu0
        %v981 = vadd.f32 %v336, %v980
        %v982 = vpop.f32.mrb[0].mxu0
        %v983 = vpop.f32.mrb[0].mxu0
        %v984 = vadd.f32 %v336, %v983
        %v985 = vpop.f32.mrb[0].mxu0
        %986 = vmatprep.mubr.bf16.mxu0 %v581
        %987 = vmatmul.mubr.bf16.gmra.mrb[0].mxu0 %v580
        %v988 = vpop.f32.mrb[0].mxu0
        %v989 = vadd.f32 %v336, %v988
        %v990 = vpop.f32.mrb[0].mxu0
        %v991 = vpop.f32.mrb[0].mxu0
        %v992 = vadd.f32 %v336, %v991
        %v993 = vpop.f32.mrb[0].mxu0
        %994 = vmatprep.mubr.bf16.mxu0 %v583
        %995 = vmatmul.mubr.bf16.gmra.mrb[0].mxu0 %v582
        %v996 = vpop.f32.mrb[0].mxu0
        %v997 = vadd.f32 %v336, %v996
        %v998 = vpop.f32.mrb[0].mxu0
        %v999 = vpop.f32.mrb[0].mxu0
        %v1000 = vadd.f32 %v336, %v999
        %v1001 = vpop.f32.mrb[0].mxu0
        %1002 = vmatprep.mubr.bf16.mxu0 %v585
        %1003 = vmatmul.mubr.bf16.gmra.mrb[0].mxu0 %v584
        %v1004 = vpop.f32.mrb[0].mxu0
        %v1005 = vadd.f32 %v336, %v1004
        %v1006 = vpop.f32.mrb[0].mxu0
        %v1007 = vpop.f32.mrb[0].mxu0
        %v1008 = vadd.f32 %v336, %v1007
        %v1009 = vpop.f32.mrb[0].mxu0
        %1010 = vmatprep.mubr.bf16.mxu0 %v587
        %1011 = vmatmul.mubr.bf16.gmra.mrb[0].mxu0 %v586
        %v1012 = vpop.f32.mrb[0].mxu0
        %v1013 = vadd.f32 %v336, %v1012
        %v1014 = vpop.f32.mrb[0].mxu0
        %v1015 = vpop.f32.mrb[0].mxu0
        %v1016 = vadd.f32 %v336, %v1015
        %v1017 = vpop.f32.mrb[0].mxu0
        %1018 = vmatprep.mubr.bf16.mxu0 %v589
        %1019 = vmatmul.mubr.bf16.gmra.mrb[0].mxu0 %v588
        %v1020 = vpop.f32.mrb[0].mxu0
        %v1021 = vadd.f32 %v336, %v1020
        %v1022 = vpop.f32.mrb[0].mxu0
        %v1023 = vpop.f32.mrb[0].mxu0
        %v1024 = vadd.f32 %v336, %v1023
        %v1025 = vpop.f32.mrb[0].mxu0
        %1026 = vmatprep.mubr.bf16.mxu0 %v591
        %1027 = vmatmul.mubr.bf16.gmra.mrb[0].mxu0 %v590
        %v1028 = vpop.f32.mrb[0].mxu0
        %v1029 = vadd.f32 %v336, %v1028
        %v1030 = vpop.f32.mrb[0].mxu0
        %v1031 = vpop.f32.mrb[0].mxu0
        %v1032 = vadd.f32 %v336, %v1031
        %v1033 = vpop.f32.mrb[0].mxu0
        %1034 = vmatprep.mubr.bf16.mxu0 %v593
        %1035 = vmatmul.mubr.bf16.gmra.mrb[0].mxu0 %v592
        %v1036 = vpop.f32.mrb[0].mxu0
        %v1037 = vadd.f32 %v336, %v1036
        %v1038 = vpop.f32.mrb[0].mxu0
        %v1039 = vpop.f32.mrb[0].mxu0
        %v1040 = vadd.f32 %v336, %v1039
        %v1041 = vpop.f32.mrb[0].mxu0
        %1042 = vdwg.mxu0
        %vm1043 = vcmp.ge.f32.partialorder %v789, 0.0
        %vm1044 = vcmp.ge.f32.partialorder %v792, 0.0
        %vm1045 = vcmp.ge.f32.partialorder %v797, 0.0
        %vm1046 = vcmp.ge.f32.partialorder %v800, 0.0
        %vm1047 = vcmp.ge.f32.partialorder %v805, 0.0
        %vm1048 = vcmp.ge.f32.partialorder %v808, 0.0
        %vm1049 = vcmp.ge.f32.partialorder %v813, 0.0
        %vm1050 = vcmp.ge.f32.partialorder %v816, 0.0
        %vm1051 = vcmp.ge.f32.partialorder %v821, 0.0
        %vm1052 = vcmp.ge.f32.partialorder %v824, 0.0
        %vm1053 = vcmp.ge.f32.partialorder %v829, 0.0
        %vm1054 = vcmp.ge.f32.partialorder %v832, 0.0
        %vm1055 = vcmp.ge.f32.partialorder %v837, 0.0
        %vm1056 = vcmp.ge.f32.partialorder %v840, 0.0
        %vm1057 = vcmp.ge.f32.partialorder %v845, 0.0
        %vm1058 = vcmp.ge.f32.partialorder %v848, 0.0
        %vm1059 = vcmp.ge.f32.partialorder %v853, 0.0
        %vm1060 = vcmp.ge.f32.partialorder %v856, 0.0
        %vm1061 = vcmp.ge.f32.partialorder %v861, 0.0
        %vm1062 = vcmp.ge.f32.partialorder %v864, 0.0
        %vm1063 = vcmp.ge.f32.partialorder %v869, 0.0
        %vm1064 = vcmp.ge.f32.partialorder %v872, 0.0
        %vm1065 = vcmp.ge.f32.partialorder %v877, 0.0
        %vm1066 = vcmp.ge.f32.partialorder %v880, 0.0
        %vm1067 = vcmp.ge.f32.partialorder %v885, 0.0
        %vm1068 = vcmp.ge.f32.partialorder %v888, 0.0
        %vm1069 = vcmp.ge.f32.partialorder %v893, 0.0
        %vm1070 = vcmp.ge.f32.partialorder %v896, 0.0
        %vm1071 = vcmp.ge.f32.partialorder %v901, 0.0
        %vm1072 = vcmp.ge.f32.partialorder %v904, 0.0
        %vm1073 = vcmp.ge.f32.partialorder %v909, 0.0
        %vm1074 = vcmp.ge.f32.partialorder %v912, 0.0
        %vm1075 = vcmp.ge.f32.partialorder %v917, 0.0
        %vm1076 = vcmp.ge.f32.partialorder %v920, 0.0
        %vm1077 = vcmp.ge.f32.partialorder %v925, 0.0
        %vm1078 = vcmp.ge.f32.partialorder %v928, 0.0
        %vm1079 = vcmp.ge.f32.partialorder %v933, 0.0
        %vm1080 = vcmp.ge.f32.partialorder %v936, 0.0
        %vm1081 = vcmp.ge.f32.partialorder %v941, 0.0
        %vm1082 = vcmp.ge.f32.partialorder %v944, 0.0
        %vm1083 = vcmp.ge.f32.partialorder %v949, 0.0
        %vm1084 = vcmp.ge.f32.partialorder %v952, 0.0
        %vm1085 = vcmp.ge.f32.partialorder %v957, 0.0
        %vm1086 = vcmp.ge.f32.partialorder %v960, 0.0
        %vm1087 = vcmp.ge.f32.partialorder %v965, 0.0
        %vm1088 = vcmp.ge.f32.partialorder %v968, 0.0
        %vm1089 = vcmp.ge.f32.partialorder %v973, 0.0
        %vm1090 = vcmp.ge.f32.partialorder %v976, 0.0
        %vm1091 = vcmp.ge.f32.partialorder %v981, 0.0
        %vm1092 = vcmp.ge.f32.partialorder %v984, 0.0
        %vm1093 = vcmp.ge.f32.partialorder %v989, 0.0
        %vm1094 = vcmp.ge.f32.partialorder %v992, 0.0
        %vm1095 = vcmp.ge.f32.partialorder %v997, 0.0
        %vm1096 = vcmp.ge.f32.partialorder %v1000, 0.0
        %vm1097 = vcmp.ge.f32.partialorder %v1005, 0.0
        %vm1098 = vcmp.ge.f32.partialorder %v1008, 0.0
        %vm1099 = vcmp.ge.f32.partialorder %v1013, 0.0
        %vm1100 = vcmp.ge.f32.partialorder %v1016, 0.0
        %vm1101 = vcmp.ge.f32.partialorder %v1021, 0.0
        %vm1102 = vcmp.ge.f32.partialorder %v1024, 0.0
        %vm1103 = vcmp.ge.f32.partialorder %v1029, 0.0
        %vm1104 = vcmp.ge.f32.partialorder %v1032, 0.0
        %vm1105 = vcmp.ge.f32.partialorder %v1037, 0.0
        %vm1106 = vcmp.ge.f32.partialorder %v1040, 0.0
        %v1107 = vld [vmem:[%s3] sm:$0x1]
        %v1109 = vlaneseq
        %v1110 = vshrl.u32 %v1109, 7
        %v1111 = vsub.s32 0, %v1110
        %v1112 = vrot.slane %v1107, %v1111
        %v1114 = vmul.f32 %v1112, %v789
        %v1115 = vmul.f32 %v1112, %v792
        %v1116 = vmul.f32 %v1112, %v797
        %v1117 = vmul.f32 %v1112, %v800
        %v1118 = vmul.f32 %v1112, %v805
        %v1119 = vmul.f32 %v1112, %v808
        %v1120 = vmul.f32 %v1112, %v813
        %v1121 = vmul.f32 %v1112, %v816
        %v1122 = vmul.f32 %v1112, %v821
        %v1123 = vmul.f32 %v1112, %v824
        %v1124 = vmul.f32 %v1112, %v829
        %v1125 = vmul.f32 %v1112, %v832
        %v1126 = vmul.f32 %v1112, %v837
        %v1127 = vmul.f32 %v1112, %v840
        %v1128 = vmul.f32 %v1112, %v845
        %v1129 = vmul.f32 %v1112, %v848
        %v1130 = vmul.f32 %v1112, %v853
        %v1131 = vmul.f32 %v1112, %v856
        %v1132 = vmul.f32 %v1112, %v861
        %v1133 = vmul.f32 %v1112, %v864
        %v1134 = vmul.f32 %v1112, %v869
        %v1135 = vmul.f32 %v1112, %v872
        %v1136 = vmul.f32 %v1112, %v877
        %v1137 = vmul.f32 %v1112, %v880
        %v1138 = vmul.f32 %v1112, %v885
        %v1139 = vmul.f32 %v1112, %v888
        %v1140 = vmul.f32 %v1112, %v893
        %v1141 = vmul.f32 %v1112, %v896
        %v1142 = vmul.f32 %v1112, %v901
        %v1143 = vmul.f32 %v1112, %v904
        %v1144 = vmul.f32 %v1112, %v909
        %v1145 = vmul.f32 %v1112, %v912
        %v1146 = vmul.f32 %v1112, %v917
        %v1147 = vmul.f32 %v1112, %v920
        %v1148 = vmul.f32 %v1112, %v925
        %v1149 = vmul.f32 %v1112, %v928
        %v1150 = vmul.f32 %v1112, %v933
        %v1151 = vmul.f32 %v1112, %v936
        %v1152 = vmul.f32 %v1112, %v941
        %v1153 = vmul.f32 %v1112, %v944
        %v1154 = vmul.f32 %v1112, %v949
        %v1155 = vmul.f32 %v1112, %v952
        %v1156 = vmul.f32 %v1112, %v957
        %v1157 = vmul.f32 %v1112, %v960
        %v1158 = vmul.f32 %v1112, %v965
        %v1159 = vmul.f32 %v1112, %v968
        %v1160 = vmul.f32 %v1112, %v973
        %v1161 = vmul.f32 %v1112, %v976
        %v1162 = vmul.f32 %v1112, %v981
        %v1163 = vmul.f32 %v1112, %v984
        %v1164 = vmul.f32 %v1112, %v989
        %v1165 = vmul.f32 %v1112, %v992
        %v1166 = vmul.f32 %v1112, %v997
        %v1167 = vmul.f32 %v1112, %v1000
        %v1168 = vmul.f32 %v1112, %v1005
        %v1169 = vmul.f32 %v1112, %v1008
        %v1170 = vmul.f32 %v1112, %v1013
        %v1171 = vmul.f32 %v1112, %v1016
        %v1172 = vmul.f32 %v1112, %v1021
        %v1173 = vmul.f32 %v1112, %v1024
        %v1174 = vmul.f32 %v1112, %v1029
        %v1175 = vmul.f32 %v1112, %v1032
        %v1176 = vmul.f32 %v1112, %v1037
        %v1177 = vmul.f32 %v1112, %v1040
        %v1178 = vsel %vm1043, %v789, %v1114
        %v1179 = vsel %vm1044, %v792, %v1115
        %v1180 = vsel %vm1045, %v797, %v1116
        %v1181 = vsel %vm1046, %v800, %v1117
        %v1182 = vsel %vm1047, %v805, %v1118
        %v1183 = vsel %vm1048, %v808, %v1119
        %v1184 = vsel %vm1049, %v813, %v1120
        %v1185 = vsel %vm1050, %v816, %v1121
        %v1186 = vsel %vm1051, %v821, %v1122
        %v1187 = vsel %vm1052, %v824, %v1123
        %v1188 = vsel %vm1053, %v829, %v1124
        %v1189 = vsel %vm1054, %v832, %v1125
        %v1190 = vsel %vm1055, %v837, %v1126
        %v1191 = vsel %vm1056, %v840, %v1127
        %v1192 = vsel %vm1057, %v845, %v1128
        %v1193 = vsel %vm1058, %v848, %v1129
        %v1194 = vsel %vm1059, %v853, %v1130
        %v1195 = vsel %vm1060, %v856, %v1131
        %v1196 = vsel %vm1061, %v861, %v1132
        %v1197 = vsel %vm1062, %v864, %v1133
        %v1198 = vsel %vm1063, %v869, %v1134
        %v1199 = vsel %vm1064, %v872, %v1135
        %v1200 = vsel %vm1065, %v877, %v1136
        %v1201 = vsel %vm1066, %v880, %v1137
        %v1202 = vsel %vm1067, %v885, %v1138
        %v1203 = vsel %vm1068, %v888, %v1139
        %v1204 = vsel %vm1069, %v893, %v1140
        %v1205 = vsel %vm1070, %v896, %v1141
        %v1206 = vsel %vm1071, %v901, %v1142
        %v1207 = vsel %vm1072, %v904, %v1143
        %v1208 = vsel %vm1073, %v909, %v1144
        %v1209 = vsel %vm1074, %v912, %v1145
        %v1210 = vsel %vm1075, %v917, %v1146
        %v1211 = vsel %vm1076, %v920, %v1147
        %v1212 = vsel %vm1077, %v925, %v1148
        %v1213 = vsel %vm1078, %v928, %v1149
        %v1214 = vsel %vm1079, %v933, %v1150
        %v1215 = vsel %vm1080, %v936, %v1151
        %v1216 = vsel %vm1081, %v941, %v1152
        %v1217 = vsel %vm1082, %v944, %v1153
        %v1218 = vsel %vm1083, %v949, %v1154
        %v1219 = vsel %vm1084, %v952, %v1155
        %v1220 = vsel %vm1085, %v957, %v1156
        %v1221 = vsel %vm1086, %v960, %v1157
        %v1222 = vsel %vm1087, %v965, %v1158
        %v1223 = vsel %vm1088, %v968, %v1159
        %v1224 = vsel %vm1089, %v973, %v1160
        %v1225 = vsel %vm1090, %v976, %v1161
        %v1226 = vsel %vm1091, %v981, %v1162
        %v1227 = vsel %vm1092, %v984, %v1163
        %v1228 = vsel %vm1093, %v989, %v1164
        %v1229 = vsel %vm1094, %v992, %v1165
        %v1230 = vsel %vm1095, %v997, %v1166
        %v1231 = vsel %vm1096, %v1000, %v1167
        %v1232 = vsel %vm1097, %v1005, %v1168
        %v1233 = vsel %vm1098, %v1008, %v1169
        %v1234 = vsel %vm1099, %v1013, %v1170
        %v1235 = vsel %vm1100, %v1016, %v1171
        %v1236 = vsel %vm1101, %v1021, %v1172
        %v1237 = vsel %vm1102, %v1024, %v1173
        %v1238 = vsel %vm1103, %v1029, %v1174
        %v1239 = vsel %vm1104, %v1032, %v1175
        %v1240 = vsel %vm1105, %v1037, %v1176
        %v1241 = vsel %vm1106, %v1040, %v1177
        %1242 = vst [vmem:[%s231] sm:$0xff] %v1178
        %1243 = vst [vmem:[%s231 + $0x8] sm:$0xff] %v1179
        %1244 = vst [vmem:[%s231 + $0x10] sm:$0xff] %v1180
        %1245 = vst [vmem:[%s231 + $0x18] sm:$0xff] %v1181
        %1246 = vst [vmem:[%s231 + $0x20] sm:$0xff] %v1182
        %1247 = vst [vmem:[%s231 + $0x28] sm:$0xff] %v1183
        %1248 = vst [vmem:[%s231 + $0x30] sm:$0xff] %v1184
        %1249 = vst [vmem:[%s231 + $0x38] sm:$0xff] %v1185
        %1250 = vst [vmem:[%s231 + $0x40] sm:$0xff] %v1186
        %1251 = vst [vmem:[%s231 + $0x48] sm:$0xff] %v1187
        %1252 = vst [vmem:[%s231 + $0x50] sm:$0xff] %v1188
        %1253 = vst [vmem:[%s231 + $0x58] sm:$0xff] %v1189
        %1254 = vst [vmem:[%s231 + $0x60] sm:$0xff] %v1190
        %1255 = vst [vmem:[%s231 + $0x68] sm:$0xff] %v1191
        %1256 = vst [vmem:[%s231 + $0x70] sm:$0xff] %v1192
        %1257 = vst [vmem:[%s231 + $0x78] sm:$0xff] %v1193
        %1258 = vst [vmem:[%s231 + $0x80] sm:$0xff] %v1194
        %1259 = vst [vmem:[%s231 + $0x88] sm:$0xff] %v1195
        %1260 = vst [vmem:[%s231 + $0x90] sm:$0xff] %v1196
        %1261 = vst [vmem:[%s231 + $0x98] sm:$0xff] %v1197
        %1262 = vst [vmem:[%s231 + $0xa0] sm:$0xff] %v1198
        %1263 = vst [vmem:[%s231 + $0xa8] sm:$0xff] %v1199
        %1264 = vst [vmem:[%s231 + $0xb0] sm:$0xff] %v1200
        %1265 = vst [vmem:[%s231 + $0xb8] sm:$0xff] %v1201
        %1266 = vst [vmem:[%s231 + $0xc0] sm:$0xff] %v1202
        %1267 = vst [vmem:[%s231 + $0xc8] sm:$0xff] %v1203
        %1268 = vst [vmem:[%s231 + $0xd0] sm:$0xff] %v1204
        %1269 = vst [vmem:[%s231 + $0xd8] sm:$0xff] %v1205
        %1270 = vst [vmem:[%s231 + $0xe0] sm:$0xff] %v1206
        %1271 = vst [vmem:[%s231 + $0xe8] sm:$0xff] %v1207
        %1272 = vst [vmem:[%s231 + $0xf0] sm:$0xff] %v1208
        %1273 = vst [vmem:[%s231 + $0xf8] sm:$0xff] %v1209
        %1274 = vst [vmem:[%s231 + $0x100] sm:$0xff] %v1210
        %1275 = vst [vmem:[%s231 + $0x108] sm:$0xff] %v1211
        %1276 = vst [vmem:[%s231 + $0x110] sm:$0xff] %v1212
        %1277 = vst [vmem:[%s231 + $0x118] sm:$0xff] %v1213
        %1278 = vst [vmem:[%s231 + $0x120] sm:$0xff] %v1214
        %1279 = vst [vmem:[%s231 + $0x128] sm:$0xff] %v1215
        %1280 = vst [vmem:[%s231 + $0x130] sm:$0xff] %v1216
        %1281 = vst [vmem:[%s231 + $0x138] sm:$0xff] %v1217
        %1282 = vst [vmem:[%s231 + $0x140] sm:$0xff] %v1218
        %1283 = vst [vmem:[%s231 + $0x148] sm:$0xff] %v1219
        %1284 = vst [vmem:[%s231 + $0x150] sm:$0xff] %v1220
        %1285 = vst [vmem:[%s231 + $0x158] sm:$0xff] %v1221
        %1286 = vst [vmem:[%s231 + $0x160] sm:$0xff] %v1222
        %1287 = vst [vmem:[%s231 + $0x168] sm:$0xff] %v1223
        %1288 = vst [vmem:[%s231 + $0x170] sm:$0xff] %v1224
        %1289 = vst [vmem:[%s231 + $0x178] sm:$0xff] %v1225
        %1290 = vst [vmem:[%s231 + $0x180] sm:$0xff] %v1226
        %1291 = vst [vmem:[%s231 + $0x188] sm:$0xff] %v1227
        %1292 = vst [vmem:[%s231 + $0x190] sm:$0xff] %v1228
        %1293 = vst [vmem:[%s231 + $0x198] sm:$0xff] %v1229
        %1294 = vst [vmem:[%s231 + $0x1a0] sm:$0xff] %v1230
        %1295 = vst [vmem:[%s231 + $0x1a8] sm:$0xff] %v1231
        %1296 = vst [vmem:[%s231 + $0x1b0] sm:$0xff] %v1232
        %1297 = vst [vmem:[%s231 + $0x1b8] sm:$0xff] %v1233
        %1298 = vst [vmem:[%s231 + $0x1c0] sm:$0xff] %v1234
        %1299 = vst [vmem:[%s231 + $0x1c8] sm:$0xff] %v1235
        %1300 = vst [vmem:[%s231 + $0x1d0] sm:$0xff] %v1236
        %1301 = vst [vmem:[%s231 + $0x1d8] sm:$0xff] %v1237
        %1302 = vst [vmem:[%s231 + $0x1e0] sm:$0xff] %v1238
        %1303 = vst [vmem:[%s231 + $0x1e8] sm:$0xff] %v1239
        %1304 = vst [vmem:[%s231 + $0x1f0] sm:$0xff] %v1240
        %1305 = vst [vmem:[%s231 + $0x1f8] sm:$0xff] %v1241
        %s1306 = sand.u32 %s119, 1
        %s1307 = scalar_lea.sflag [#allocation4], %s1306
        %s1308 = sand.u32 %s119, 1
        %s1309 = smul.addr %s1308, 512
        %s1310 = scalar_lea.vmem [#allocation7], %s1309
        // Predicated region
        $region45: #{tpu_custom_call.1} parent=35 // pred_check
          %p1311 = pneg %p129
        $region46: #{tpu_custom_call.1} parent=35 // pred_check_branch
          %1313 = sbr.rel (%p1311) target = $region48
        $region47: #{tpu_custom_call.1} parent=35 // pred_region
          %s1314 = smul.u32 64, %s22
          %s1316 = ssub.s32 8192, 8192
          %1317 = vsyncadd %s1307, %s1316
          %s1318 = smul.addr %s1314, 128
          %s1319 = scalar_lea.hbm %s4, %s1318
          %s1320 = sshll.u32 %s1310, 4
          %s1321 = int_to_ptr.vmem [resolvable:$true] %s1320
          %1326 = dma.vmem_to_hbm [thread:$0]  %s1321, 8192, %s1319, %s1307, 128, 128, 8
        $region48: #{tpu_custom_call.1} parent=35 // pred_fallthru
          _
      $region36: #{tpu_custom_call.1} parent=5 // pred_fallthru
        _
      %p1327 = scmp.le.s32.totalorder 2, %s17
      // Predicated region
      $region49: #{tpu_custom_call.1} parent=5 // pred_check
        %p1328 = pneg %p1327
      $region50: #{tpu_custom_call.1} parent=5 // pred_check_branch
        %1330 = sbr.rel (%p1328) target = $region52
      $region51: #{tpu_custom_call.1} parent=5 // pred_region
        %s1331 = ssub.s32 %s17, 2
        // Predicated region
        $region53: #{tpu_custom_call.1} parent=51 // pred_check
          %p1332 = pneg %p135
        $region54: #{tpu_custom_call.1} parent=51 // pred_check_branch
          %1334 = sbr.rel (%p1332) target = $region56
        $region55: #{tpu_custom_call.1} parent=51 // pred_region
          %s1335 = sand.u32 %s120, 1
          %s1336 = scalar_lea.sflag [#allocation4], %s1335
          %s1337 = sand.u32 %s120, 1
          %s1338 = smul.addr %s1337, 512
          %s1339 = scalar_lea.vmem [#allocation7], %s1338
          %1340 = dma.done %s1336, 8192
        $region56: #{tpu_custom_call.1} parent=51 // pred_fallthru
          _
      $region52: #{tpu_custom_call.1} parent=5 // pred_fallthru
        _
    $region6: #{tpu_custom_call.1} parent=1 // loop_footer
      %s21 = sadd.s32 1, %s17
    $region7: #{tpu_custom_call.1} parent=1 // loop_footer_branch
      %16 = sbr.rel target = $region3
    $region8: #{tpu_custom_call.1} parent=1 // loop_exit
      _
    %1341 = vsyncpa [#allocation3], 1
    %s1342 = scalar_lea.sflag [#allocation3], 1
    %1343 = vsyncpa %s1342, 1
    %1344 = vsyncpa [#allocation6], 1
    %1345 = vsyncpa [#allocation4], 1
    %s1346 = scalar_lea.sflag [#allocation4], 1
    %1347 = vsyncpa %s1346, 1

</llo_original>
